<compile_context>
chip_gen: v7x
topology: tpu7x:2x2x1
jax: 0.10.0
libtpu: 0.0.40
codegen_flags: <defaults>
</compile_context>

<pallas_src>
import jax
import jax.numpy as jnp
import numpy as np
from jax.experimental import pallas as pl
from jax.experimental.pallas import tpu as pltpu

# ----------------------------- configuration --------------------------------
B, C, H, W = 2, 4, 16, 16          # input batch (NCHW)
LOCAL = 8                          # local crop spatial size
HID = 32                           # backbone hidden width
OUT_DIM = 128                      # feature / DINO head dim (model.fc.in_features)
N_GLOBAL = 2                       # DINO always uses 2 global crops
N_LOCAL = 2                        # cfgs.local_crops_number
NCROPS = N_GLOBAL + N_LOCAL
N_TERMS = N_GLOBAL * (NCROPS - 1)  # number of (teacher, student) loss pairs
STUDENT_TEMP = 0.1
WARMUP_TEACHER_TEMP = 0.04
TEACHER_TEMP = 0.04
WARMUP_TEACHER_TEMP_EPOCHS = 0
EPOCHS = 10


# ------------------------- constant selection matrices ----------------------
def _make_pair_mask():
    """(NCROPS*B, NCROPS*B) mask: 1 where (teacher row i, student row j) is a
    valid DINO pair: same batch index, teacher crop is global, crops differ."""
    w = np.zeros((NCROPS * B, NCROPS * B), np.float32)
    for iq in range(N_GLOBAL):
        for v in range(NCROPS):
            if v == iq:
                continue
            for b in range(B):
                w[iq * B + b, v * B + b] = 1.0
    return w


def _make_global_mean_mat():
    """(B, NCROPS*B) matrix averaging the student global-crop features."""
    a = np.zeros((B, NCROPS * B), np.float32)
    for g in range(N_GLOBAL):
        for b in range(B):
            a[b, g * B + b] = 1.0 / N_GLOBAL
    return a


PAIR_MASK = jnp.asarray(_make_pair_mask())              # (8, 8)
GLOBAL_MEAN_MAT = jnp.asarray(_make_global_mean_mat())  # (B, 8)


# ----------------------------- Pallas kernels --------------------------------
def fused_train_kernel(inv_temps_ref,                       # SMEM (2,) f32
                       pooled_ref,                          # (NCROPS*B, C)
                       sw1_ref, sb1_ref, sw2_ref, sb2_ref,  # student params
                       tw1_ref, tb1_ref, tw2_ref, tb2_ref,  # teacher params
                       center_ref,                          # (1, OUT_DIM)
                       pair_mask_ref,                       # (NCROPS*B, NCROPS*B)
                       gmean_ref,                           # (B, NCROPS*B)
                       loss_ref,                            # (1, 1)
                       feat_ref):                           # (B, OUT_DIM)
    inv_s_temp = inv_temps_ref[0]
    inv_t_temp = inv_temps_ref[1]

    pooled = pooled_ref[...]                                # (8, C) crop-major

    # ---- student backbone on ALL crops in one shot: (8,C)->(8,HID)->(8,OUT) ----
    h_s = jnp.dot(pooled, sw1_ref[...],
                  preferred_element_type=jnp.float32) + sb1_ref[...]
    h_s = jnp.maximum(h_s, 0.0)
    s_feat = jnp.dot(h_s, sw2_ref[...],
                     preferred_element_type=jnp.float32) + sb2_ref[...]   # (8,128)

    # ---- teacher backbone sharing the same pooled activations.  Runs on all
    #      8 rows to keep every op a full-sublane tile; local-crop rows are
    #      masked out of the loss below. ----
    h_t = jnp.dot(pooled, tw1_ref[...],
                  preferred_element_type=jnp.float32) + tb1_ref[...]
    h_t = jnp.maximum(h_t, 0.0)
    t_feat = jnp.dot(h_t, tw2_ref[...],
                     preferred_element_type=jnp.float32) + tb2_ref[...]   # (8,128)

    # ---- student log-softmax: ONE (8,128) pass for every crop ----
    s = s_feat * inv_s_temp
    smax = jnp.max(s, axis=-1, keepdims=True)
    lse = jnp.log(jnp.sum(jnp.exp(s - smax), axis=-1, keepdims=True)) + smax
    log_p = s - lse                                                        # (8,128)

    # ---- teacher centered + sharpened softmax: ONE (8,128) pass ----
    t = (t_feat - center_ref[...]) * inv_t_temp
    tmax = jnp.max(t, axis=-1, keepdims=True)
    texp = jnp.exp(t - tmax)
    tsum = jnp.sum(texp, axis=-1, keepdims=True)
    q = texp * pl.reciprocal(tsum, approx=True)                            # (8,128)

    # ---- all cross terms at once: M[i, j] = <q_i, log_p_j> over the feature dim,
    #      then select the valid (same-batch, different-crop, teacher-global)
    #      pairs with a constant mask.  loss = -sum(mask*M) / (B * n_terms). ----
    m = jax.lax.dot_general(q, log_p, (((1,), (1,)), ((), ())),
                            preferred_element_type=jnp.float32)            # (8,8)
    masked = m * pair_mask_ref[...]
    tot = jnp.sum(jnp.sum(masked, axis=-1, keepdims=True), axis=0,
                  keepdims=True)                                           # (1,1)
    loss_ref[...] = tot * (-1.0 / (B * N_TERMS))

    # ---- forward_feature = mean of student global-crop features ----
    feat_ref[...] = jnp.dot(gmean_ref[...], s_feat,
                            preferred_element_type=jnp.float32)            # (B,128)


def fused_train_forward(pooled, inv_temps, student_params, teacher_params,
                        center):
    vmem = pl.BlockSpec(memory_space=pltpu.MemorySpace.VMEM)
    smem = pl.BlockSpec(memory_space=pltpu.MemorySpace.SMEM)
    loss, feat = pl.pallas_call(
        fused_train_kernel,
        out_shape=(jax.ShapeDtypeStruct((1, 1), jnp.float32),
                   jax.ShapeDtypeStruct((B, OUT_DIM), jnp.float32)),
        in_specs=[smem] + [vmem] * 12,
        out_specs=(vmem, vmem),
    )(inv_temps, pooled, *student_params, *teacher_params, center,
      PAIR_MASK, GLOBAL_MEAN_MAT)
    return loss[0, 0], feat


def backbone_kernel(pooled_ref, w1_ref, b1_ref, w2_ref, b2_ref, o_ref):
    """Val path: pooled (B, C) -> Linear -> ReLU -> Linear, single call."""
    h = jnp.dot(pooled_ref[...], w1_ref[...],
                preferred_element_type=jnp.float32) + b1_ref[...]
    h = jnp.maximum(h, 0.0)
    o_ref[...] = jnp.dot(h, w2_ref[...],
                         preferred_element_type=jnp.float32) + b2_ref[...]


def backbone_forward(pooled, w1, b1, w2, b2):
    vmem = pl.BlockSpec(memory_space=pltpu.MemorySpace.VMEM)
    return pl.pallas_call(
        backbone_kernel,
        out_shape=jax.ShapeDtypeStruct((pooled.shape[0], OUT_DIM), jnp.float32),
        in_specs=[vmem] * 5,
        out_specs=vmem,
    )(pooled, w1, b1, w2, b2)


# ----------------------------- wrapper (glue) --------------------------------
def deterministic_augmentation(x):
    """Deterministic stand-in for DINOAugV1: 2 global + N_LOCAL local crops."""
    norm = lambda im: (im - 0.5) / 0.5
    g0 = norm(x)                                           # global crop 0
    g1 = norm(x[:, :, :, ::-1])                            # global crop 1 (h-flip)
    off = (H - LOCAL) // 2
    l0 = norm(x[:, :, off:off + LOCAL, off:off + LOCAL])   # center local crop
    l1 = norm(x[:, :, :LOCAL, :LOCAL])                     # top-left local crop
    return [g0, g1], [l0, l1]


def pool_crops(crops):
    """Global-average-pool each crop (ragged spatial sizes) in plain JAX and
    stack crop-major into a dense (n_crops*B, C) tile for the fused kernel."""
    pooled = [c.mean(axis=(2, 3)) for c in crops]          # each (B, C)
    return jnp.concatenate(pooled, axis=0)                 # (n_crops*B, C)


class DINOWrapperPallas:
    def __init__(self, key):
        k1, k2 = jax.random.split(key)
        w1 = jax.random.normal(k1, (C, HID), jnp.float32) * 0.1
        b1 = jnp.zeros((1, HID), jnp.float32)
        w2 = jax.random.normal(k2, (HID, OUT_DIM), jnp.float32) * 0.1
        b2 = jnp.zeros((1, OUT_DIM), jnp.float32)
        self.student_params = (w1, b1, w2, b2)
        # teacher = deepcopy(student) + load_state_dict -> identical params
        self.teacher_params = tuple(jnp.array(p) for p in self.student_params)
        # DINOLossV1 center buffer
        self.center = jnp.zeros((1, OUT_DIM), jnp.float32)
        # teacher temperature schedule (DINO-v1)
        warm = np.linspace(WARMUP_TEACHER_TEMP, TEACHER_TEMP,
                           WARMUP_TEACHER_TEMP_EPOCHS)
        rest = np.ones(EPOCHS - WARMUP_TEACHER_TEMP_EPOCHS) * TEACHER_TEMP
        self.teacher_temp_schedule = np.concatenate([warm, rest])

    def __call__(self, x, epoch=0, mode="train"):
        if mode == "train":
            return self.train_forward(x, epoch)
        elif mode == "val":
            return self.infer_forward(x)
        raise NotImplementedError

    def train_forward(self, x, epoch):
        global_crops, local_crops = deterministic_augmentation(x)
        pooled = pool_crops(global_crops + local_crops)    # (NCROPS*B, C)
        # temperatures as runtime SMEM scalars -> one compiled kernel for all
        # epochs of the schedule (no trace-constant recompiles).
        inv_temps = jnp.array(
            [1.0 / STUDENT_TEMP,
             1.0 / float(self.teacher_temp_schedule[epoch])], jnp.float32)
        loss, forward_feature = fused_train_forward(
            pooled, inv_temps, self.student_params, self.teacher_params,
            self.center)
        return forward_feature, loss

    def infer_forward(self, x):
        xn = (x - 0.5) / 0.5
        pooled = xn.mean(axis=(2, 3))                      # (B, C)
        return backbone_forward(pooled, *self.teacher_params)


# ----------------------------- pure-JAX reference ----------------------------
def _backbone_ref(pooled, params):
    w1, b1, w2, b2 = params
    h = jnp.maximum(pooled @ w1 + b1, 0.0)
    return h @ w2 + b2


def reference_forward(wrapper, x, epoch):
    global_crops, local_crops = deterministic_augmentation(x)
    pooled = [c.mean(axis=(2, 3)) for c in global_crops + local_crops]
    s_feat = jnp.stack([_backbone_ref(p, wrapper.student_params)
                        for p in pooled], 0)               # (NCROPS, B, D)
    t_feat = jnp.stack([_backbone_ref(p, wrapper.teacher_params)
                        for p in pooled[:N_GLOBAL]], 0)    # (N_GLOBAL, B, D)
    t_temp = float(wrapper.teacher_temp_schedule[epoch])
    q = jax.nn.softmax((t_feat - wrapper.center[None]) / t_temp, axis=-1)
    log_p = jax.nn.log_softmax(s_feat / STUDENT_TEMP, axis=-1)
    total, n_terms = 0.0, 0
    for iq in range(N_GLOBAL):
        for v in range(NCROPS):
            if v == iq:
                continue
            total = total + jnp.mean(jnp.sum(-q[iq] * log_p[v], axis=-1))
            n_terms += 1
    return s_feat[:N_GLOBAL].mean(0), total / n_terms


# ----------------------------------- main ------------------------------------
if __name__ == "__main__":
    key = jax.random.PRNGKey(0)
    k_param, k_data = jax.random.split(key)
    wrapper = DINOWrapperPallas(k_param)

    x = jax.random.normal(k_data, (B, C, H, W), jnp.float32)

    forward_feature, loss = wrapper(x, epoch=0, mode="train")
    forward_feature = jax.block_until_ready(forward_feature)
    loss = jax.block_until_ready(loss)

    val_feat = jax.block_until_ready(wrapper(x, mode="val"))

    ref_feat, ref_loss = reference_forward(wrapper, x, epoch=0)
    ref_val = _backbone_ref(((x - 0.5) / 0.5).mean(axis=(2, 3)),
                            wrapper.teacher_params)

    assert forward_feature.shape == (B, OUT_DIM)
    assert loss.shape == ()
    assert val_feat.shape == (B, OUT_DIM)
    assert jnp.allclose(forward_feature, ref_feat, rtol=1e-2, atol=1e-2)
    assert jnp.allclose(loss, ref_loss, rtol=1e-2, atol=1e-2)
    assert jnp.allclose(val_feat, ref_val, rtol=1e-2, atol=1e-2)

    print("KERNEL_OK")
</pallas_src>

<mosaic_0001>
module attributes {stable_mosaic.version = 11 : i64} {
  func.func @fused_train_kernel(%arg0: memref<2xf32, #tpu.memory_space<smem>>, %arg1: memref<8x4xf32, #tpu.memory_space<vmem>>, %arg2: memref<4x32xf32, #tpu.memory_space<vmem>>, %arg3: memref<1x32xf32, #tpu.memory_space<vmem>>, %arg4: memref<32x128xf32, #tpu.memory_space<vmem>>, %arg5: memref<1x128xf32, #tpu.memory_space<vmem>>, %arg6: memref<4x32xf32, #tpu.memory_space<vmem>>, %arg7: memref<1x32xf32, #tpu.memory_space<vmem>>, %arg8: memref<32x128xf32, #tpu.memory_space<vmem>>, %arg9: memref<1x128xf32, #tpu.memory_space<vmem>>, %arg10: memref<1x128xf32, #tpu.memory_space<vmem>>, %arg11: memref<8x8xf32, #tpu.memory_space<vmem>>, %arg12: memref<2x8xf32, #tpu.memory_space<vmem>>, %arg13: memref<1x1xf32, #tpu.memory_space<vmem>>, %arg14: memref<2x128xf32, #tpu.memory_space<vmem>>) attributes {dimension_semantics = [], scalar_prefetch = 0 : i64, scratch_operands = 0 : i64, tpu.core_type = #tpu.core_type<tc>} {
    %c0 = arith.constant 0 : index
    %0 = memref.load %arg0[%c0] : memref<2xf32, #tpu.memory_space<smem>>
    %c1 = arith.constant 1 : index
    %1 = memref.load %arg0[%c1] : memref<2xf32, #tpu.memory_space<smem>>
    %c0_0 = arith.constant 0 : index
    %c0_1 = arith.constant 0 : index
    %2 = vector.load %arg1[%c0_0, %c0_1] : memref<8x4xf32, #tpu.memory_space<vmem>>, vector<8x4xf32>
    %c0_2 = arith.constant 0 : index
    %c0_3 = arith.constant 0 : index
    %3 = vector.load %arg2[%c0_2, %c0_3] : memref<4x32xf32, #tpu.memory_space<vmem>>, vector<4x32xf32>
    %cst = arith.constant dense<0.000000e+00> : vector<8x32xf32>
    %4 = tpu.matmul %2, %3, %cst {dimension_numbers = #tpu.dot_dimension_numbers<[1], [0], [0], [1], [0, 0, 1, 1], [], []>} : vector<8x4xf32>, vector<4x32xf32>, vector<8x32xf32> -> vector<8x32xf32>
    %c0_4 = arith.constant 0 : index
    %c0_5 = arith.constant 0 : index
    %5 = vector.load %arg3[%c0_4, %c0_5] : memref<1x32xf32, #tpu.memory_space<vmem>>, vector<1x32xf32>
    %6 = vector.broadcast %5 : vector<1x32xf32> to vector<8x32xf32>
    %7 = arith.addf %4, %6 : vector<8x32xf32>
    %cst_6 = arith.constant 0.000000e+00 : f32
    %8 = vector.broadcast %cst_6 : f32 to vector<8x32xf32>
    %9 = arith.maximumf %7, %8 : vector<8x32xf32>
    %c0_7 = arith.constant 0 : index
    %c0_8 = arith.constant 0 : index
    %10 = vector.load %arg4[%c0_7, %c0_8] : memref<32x128xf32, #tpu.memory_space<vmem>>, vector<32x128xf32>
    %cst_9 = arith.constant dense<0.000000e+00> : vector<8x128xf32>
    %11 = tpu.matmul %9, %10, %cst_9 {dimension_numbers = #tpu.dot_dimension_numbers<[1], [0], [0], [1], [0, 0, 1, 1], [], []>} : vector<8x32xf32>, vector<32x128xf32>, vector<8x128xf32> -> vector<8x128xf32>
    %c0_10 = arith.constant 0 : index
    %c0_11 = arith.constant 0 : index
    %12 = vector.load %arg5[%c0_10, %c0_11] : memref<1x128xf32, #tpu.memory_space<vmem>>, vector<1x128xf32>
    %13 = vector.broadcast %12 : vector<1x128xf32> to vector<8x128xf32>
    %14 = arith.addf %11, %13 : vector<8x128xf32>
    %c0_12 = arith.constant 0 : index
    %c0_13 = arith.constant 0 : index
    %15 = vector.load %arg6[%c0_12, %c0_13] : memref<4x32xf32, #tpu.memory_space<vmem>>, vector<4x32xf32>
    %cst_14 = arith.constant dense<0.000000e+00> : vector<8x32xf32>
    %16 = tpu.matmul %2, %15, %cst_14 {dimension_numbers = #tpu.dot_dimension_numbers<[1], [0], [0], [1], [0, 0, 1, 1], [], []>} : vector<8x4xf32>, vector<4x32xf32>, vector<8x32xf32> -> vector<8x32xf32>
    %c0_15 = arith.constant 0 : index
    %c0_16 = arith.constant 0 : index
    %17 = vector.load %arg7[%c0_15, %c0_16] : memref<1x32xf32, #tpu.memory_space<vmem>>, vector<1x32xf32>
    %18 = vector.broadcast %17 : vector<1x32xf32> to vector<8x32xf32>
    %19 = arith.addf %16, %18 : vector<8x32xf32>
    %cst_17 = arith.constant 0.000000e+00 : f32
    %20 = vector.broadcast %cst_17 : f32 to vector<8x32xf32>
    %21 = arith.maximumf %19, %20 : vector<8x32xf32>
    %c0_18 = arith.constant 0 : index
    %c0_19 = arith.constant 0 : index
    %22 = vector.load %arg8[%c0_18, %c0_19] : memref<32x128xf32, #tpu.memory_space<vmem>>, vector<32x128xf32>
    %cst_20 = arith.constant dense<0.000000e+00> : vector<8x128xf32>
    %23 = tpu.matmul %21, %22, %cst_20 {dimension_numbers = #tpu.dot_dimension_numbers<[1], [0], [0], [1], [0, 0, 1, 1], [], []>} : vector<8x32xf32>, vector<32x128xf32>, vector<8x128xf32> -> vector<8x128xf32>
    %c0_21 = arith.constant 0 : index
    %c0_22 = arith.constant 0 : index
    %24 = vector.load %arg9[%c0_21, %c0_22] : memref<1x128xf32, #tpu.memory_space<vmem>>, vector<1x128xf32>
    %25 = vector.broadcast %24 : vector<1x128xf32> to vector<8x128xf32>
    %26 = arith.addf %23, %25 : vector<8x128xf32>
    %27 = vector.broadcast %0 : f32 to vector<8x128xf32>
    %28 = arith.mulf %14, %27 : vector<8x128xf32>
    %cst_23 = arith.constant dense<0xFF800000> : vector<8xf32>
    %29 = vector.multi_reduction <maximumf>, %28, %cst_23 [1] : vector<8x128xf32> to vector<8xf32>
    %30 = vector.shape_cast %29 : vector<8xf32> to vector<8x1xf32>
    %31 = vector.broadcast %30 : vector<8x1xf32> to vector<8x128xf32>
    %32 = arith.subf %28, %31 : vector<8x128xf32>
    %33 = math.exp %32 : vector<8x128xf32>
    %cst_24 = arith.constant dense<0.000000e+00> : vector<8xf32>
    %34 = vector.multi_reduction <add>, %33, %cst_24 [1] : vector<8x128xf32> to vector<8xf32>
    %35 = vector.shape_cast %34 : vector<8xf32> to vector<8x1xf32>
    %36 = math.log %35 : vector<8x1xf32>
    %37 = arith.addf %36, %30 : vector<8x1xf32>
    %38 = vector.broadcast %37 : vector<8x1xf32> to vector<8x128xf32>
    %39 = arith.subf %28, %38 : vector<8x128xf32>
    %c0_25 = arith.constant 0 : index
    %c0_26 = arith.constant 0 : index
    %40 = vector.load %arg10[%c0_25, %c0_26] : memref<1x128xf32, #tpu.memory_space<vmem>>, vector<1x128xf32>
    %41 = vector.broadcast %40 : vector<1x128xf32> to vector<8x128xf32>
    %42 = arith.subf %26, %41 : vector<8x128xf32>
    %43 = vector.broadcast %1 : f32 to vector<8x128xf32>
    %44 = arith.mulf %42, %43 : vector<8x128xf32>
    %cst_27 = arith.constant dense<0xFF800000> : vector<8xf32>
    %45 = vector.multi_reduction <maximumf>, %44, %cst_27 [1] : vector<8x128xf32> to vector<8xf32>
    %46 = vector.shape_cast %45 : vector<8xf32> to vector<8x1xf32>
    %47 = vector.broadcast %46 : vector<8x1xf32> to vector<8x128xf32>
    %48 = arith.subf %44, %47 : vector<8x128xf32>
    %49 = math.exp %48 : vector<8x128xf32>
    %cst_28 = arith.constant dense<0.000000e+00> : vector<8xf32>
    %50 = vector.multi_reduction <add>, %49, %cst_28 [1] : vector<8x128xf32> to vector<8xf32>
    %51 = vector.shape_cast %50 : vector<8xf32> to vector<8x1xf32>
    %52 = tpu.reciprocal %51 {approx = true} : vector<8x1xf32> -> vector<8x1xf32>
    %53 = vector.broadcast %52 : vector<8x1xf32> to vector<8x128xf32>
    %54 = arith.mulf %49, %53 : vector<8x128xf32>
    %cst_29 = arith.constant dense<0.000000e+00> : vector<8x8xf32>
    %55 = tpu.matmul %54, %39, %cst_29 {dimension_numbers = #tpu.dot_dimension_numbers<[1], [1], [0], [0], [0, 0, 1, 0], [], []>} : vector<8x128xf32>, vector<8x128xf32>, vector<8x8xf32> -> vector<8x8xf32>
    %c0_30 = arith.constant 0 : index
    %c0_31 = arith.constant 0 : index
    %56 = vector.load %arg11[%c0_30, %c0_31] : memref<8x8xf32, #tpu.memory_space<vmem>>, vector<8x8xf32>
    %57 = arith.mulf %55, %56 : vector<8x8xf32>
    %cst_32 = arith.constant dense<0.000000e+00> : vector<8xf32>
    %58 = vector.multi_reduction <add>, %57, %cst_32 [1] : vector<8x8xf32> to vector<8xf32>
    %59 = vector.shape_cast %58 : vector<8xf32> to vector<8x1xf32>
    %cst_33 = arith.constant dense<0.000000e+00> : vector<1xf32>
    %60 = vector.multi_reduction <add>, %59, %cst_33 [0] : vector<8x1xf32> to vector<1xf32>
    %61 = vector.shape_cast %60 : vector<1xf32> to vector<1x1xf32>
    %cst_34 = arith.constant -0.0833333358 : f32
    %62 = vector.broadcast %cst_34 : f32 to vector<1x1xf32>
    %63 = arith.mulf %61, %62 : vector<1x1xf32>
    %c0_35 = arith.constant 0 : index
    %c0_36 = arith.constant 0 : index
    %64 = vector.load %arg13[%c0_35, %c0_36] : memref<1x1xf32, #tpu.memory_space<vmem>>, vector<1x1xf32>
    tpu.vector_store %arg13[%c0_35, %c0_36], %63 {strides = array<i32>} : memref<1x1xf32, #tpu.memory_space<vmem>>, vector<1x1xf32>,
    %c0_37 = arith.constant 0 : index
    %c0_38 = arith.constant 0 : index
    %65 = vector.load %arg12[%c0_37, %c0_38] : memref<2x8xf32, #tpu.memory_space<vmem>>, vector<2x8xf32>
    %cst_39 = arith.constant dense<0.000000e+00> : vector<2x128xf32>
    %66 = tpu.matmul %65, %14, %cst_39 {dimension_numbers = #tpu.dot_dimension_numbers<[1], [0], [0], [1], [0, 0, 1, 1], [], []>} : vector<2x8xf32>, vector<8x128xf32>, vector<2x128xf32> -> vector<2x128xf32>
    %c0_40 = arith.constant 0 : index
    %c0_41 = arith.constant 0 : index
    %67 = vector.load %arg14[%c0_40, %c0_41] : memref<2x128xf32, #tpu.memory_space<vmem>>, vector<2x128xf32>
    tpu.vector_store %arg14[%c0_40, %c0_41], %66 {strides = array<i32>} : memref<2x128xf32, #tpu.memory_space<vmem>>, vector<2x128xf32>,
    return
  }
}

</mosaic_0001>

<llo_original>
// kernel: tpu_custom_call.1
$region0: #{tpu_custom_call.1}
  #allocation0 [shape = 'u32[]', space=smem, size = 0x4, offset = 0x4, fixed_abs, tag = 'smem constant byte address 0x4 - core index']
  #allocation1 [shape = 'u32[144,128]{1,0:T(1,128)}', space=vmem, size = 0x12000, scoped, tag = 'internal scratch']
  %s0 = inlined_call_operand.hbm [shape: f32[2], index: 0, kind: input, shape index: {}]
  %s1 = inlined_call_operand.vmem [shape: f32[8,4], index: 1, kind: input, shape index: {}]
  %s2 = inlined_call_operand.hbm [shape: f32[4,32], index: 2, kind: input, shape index: {}]
  %s3 = inlined_call_operand.hbm [shape: f32[1,32], index: 3, kind: input, shape index: {}]
  %s4 = inlined_call_operand.hbm [shape: f32[32,128], index: 4, kind: input, shape index: {}]
  %s5 = inlined_call_operand.hbm [shape: f32[1,128], index: 5, kind: input, shape index: {}]
  %s6 = inlined_call_operand.hbm [shape: f32[4,32], index: 6, kind: input, shape index: {}]
  %s7 = inlined_call_operand.hbm [shape: f32[1,32], index: 7, kind: input, shape index: {}]
  %s8 = inlined_call_operand.vmem [shape: f32[32,128], index: 8, kind: input, shape index: {}]
  %s9 = inlined_call_operand.vmem [shape: f32[1,128], index: 9, kind: input, shape index: {}]
  %s10 = inlined_call_operand.vmem [shape: f32[1,128], index: 10, kind: input, shape index: {}]
  %s11 = inlined_call_operand.vmem [shape: f32[8,8], index: 11, kind: input, shape index: {}]
  %s12 = inlined_call_operand.vmem [shape: f32[2,8], index: 12, kind: input, shape index: {}]
  %s13 = inlined_call_operand.hbm [shape: f32[1,1], index: 13, kind: output, shape index: {0}]
  %s14 = inlined_call_operand.hbm [shape: f32[2,128], index: 14, kind: output, shape index: {1}]
  %15 = xla_tuple %s13, %s14
  %s16 = sld [smem:[#allocation0]]
  $region98: #{tpu_custom_call.1} parent=0
    _
  %s18 = ssub.s32 1, %s16
  %s19 = scalar_select 0, %s18, %s16
  $region1: #{tpu_custom_call.1} parent=0
    #allocation2 [shape = 'u8[512]{0}', space=smem, size = 0x200, scoped, tag = 'input window, operand 0, single buffered']
    #allocation3 [shape = 's32[1]{0}', space=sflag, size = 0x4, scoped, tag = 'scoped memory for tpu_custom_call.1']
    #allocation4 [shape = 's32[1]{0}', space=sflag, size = 0x4, scoped, tag = 'scoped memory for tpu_custom_call.1']
    #allocation5 [shape = 's32[1]{0}', space=sflag, size = 0x4, scoped, tag = 'scoped memory for tpu_custom_call.1']
    #allocation6 [shape = 'u8[2048]{0}', space=vmem, size = 0x800, scoped, tag = 'input window, operand 2, single buffered']
    #allocation7 [shape = 'u8[512]{0}', space=vmem, size = 0x400, scoped, tag = 'input window, operand 3, single buffered']
    #allocation8 [shape = 's32[1]{0}', space=sflag, size = 0x4, scoped, tag = 'scoped memory for tpu_custom_call.1']
    #allocation9 [shape = 'u8[16384]{0}', space=vmem, size = 0x4000, scoped, tag = 'input window, operand 4, single buffered']
    #allocation10 [shape = 'u8[512]{0}', space=vmem, size = 0x400, scoped, tag = 'input window, operand 5, single buffered']
    #allocation11 [shape = 's32[1]{0}', space=sflag, size = 0x4, scoped, tag = 'scoped memory for tpu_custom_call.1']
    #allocation12 [shape = 'u8[2048]{0}', space=vmem, size = 0x800, scoped, tag = 'input window, operand 6, single buffered']
    #allocation13 [shape = 'u8[512]{0}', space=vmem, size = 0x400, scoped, tag = 'input window, operand 7, single buffered']
    #allocation14 [shape = 's32[1]{0}', space=sflag, size = 0x4, scoped, tag = 'scoped memory for tpu_custom_call.1']
    #allocation15 [shape = 'u8[512]{0}', space=vmem, size = 0x400, scoped, tag = 'output window, operand 0, single buffered']
    #allocation16 [shape = 'u8[1024]{0}', space=vmem, size = 0x400, scoped, tag = 'output window, operand 1, single buffered']
    #allocation17 [shape = 's32[1]{0}', space=sflag, size = 0x4, scoped, tag = 'scoped memory for tpu_custom_call.1']
    %20 = vsyncpa [#allocation5], 0
    %21 = vsyncpa [#allocation3], 0
    %22 = vsyncpa [#allocation8], 0
    %23 = vsyncpa [#allocation11], 0
    %24 = vsyncpa [#allocation14], 0
    %25 = vsyncpa [#allocation4], 0
    %26 = vsyncpa [#allocation17], 0
    // Predicated region
    $region2: #{tpu_custom_call.1} parent=1 // pred_check
      _
    $region3: #{tpu_custom_call.1} parent=1 // pred_check_branch
      %28 = sbr.rel (0) target = $region5
    $region4: #{tpu_custom_call.1} parent=1 // pred_region
      %s30 = ssub.s32 16, 16
      %31 = vsyncadd [#allocation5], %s30
      %34 = dma.hbm_to_smem %s0, 16, [#allocation2], [#allocation5]
    $region5: #{tpu_custom_call.1} parent=1 // pred_fallthru
      _
    // Predicated region
    $region6: #{tpu_custom_call.1} parent=1 // pred_check
      _
    $region7: #{tpu_custom_call.1} parent=1 // pred_check_branch
      %36 = sbr.rel (0) target = $region9
    $region8: #{tpu_custom_call.1} parent=1 // pred_region
      _
    $region9: #{tpu_custom_call.1} parent=1 // pred_fallthru
      _
    // Predicated region
    $region10: #{tpu_custom_call.1} parent=1 // pred_check
      _
    $region11: #{tpu_custom_call.1} parent=1 // pred_check_branch
      %38 = sbr.rel (0) target = $region13
    $region12: #{tpu_custom_call.1} parent=1 // pred_region
      %s40 = ssub.s32 64, 64
      %41 = vsyncadd [#allocation3], %s40
      %s43 = sshll.u32 [#allocation6], 4
      %s44 = int_to_ptr.vmem [resolvable:$true] %s43
      %46 = dma.hbm_to_vmem [thread:$0]  %s2, 64, %s44, [#allocation3]
    $region13: #{tpu_custom_call.1} parent=1 // pred_fallthru
      _
    // Predicated region
    $region14: #{tpu_custom_call.1} parent=1 // pred_check
      _
    $region15: #{tpu_custom_call.1} parent=1 // pred_check_branch
      %48 = sbr.rel (0) target = $region17
    $region16: #{tpu_custom_call.1} parent=1 // pred_region
      %s50 = ssub.s32 16, 16
      %51 = vsyncadd [#allocation8], %s50
      %s53 = sshll.u32 [#allocation7], 4
      %s54 = int_to_ptr.vmem [resolvable:$true] %s53
      %56 = dma.hbm_to_vmem [thread:$0]  %s3, 16, %s54, [#allocation8]
    $region17: #{tpu_custom_call.1} parent=1 // pred_fallthru
      _
    // Predicated region
    $region18: #{tpu_custom_call.1} parent=1 // pred_check
      _
    $region19: #{tpu_custom_call.1} parent=1 // pred_check_branch
      %58 = sbr.rel (0) target = $region21
    $region20: #{tpu_custom_call.1} parent=1 // pred_region
      %s60 = ssub.s32 512, 512
      %61 = vsyncadd [#allocation8], %s60
      %s62 = sshll.u32 [#allocation9], 4
      %s63 = int_to_ptr.vmem [resolvable:$true] %s62
      %68 = dma.hbm_to_vmem [thread:$0]  %s4, 512, %s63, [#allocation8], 128, 128, 8
    $region21: #{tpu_custom_call.1} parent=1 // pred_fallthru
      _
    // Predicated region
    $region22: #{tpu_custom_call.1} parent=1 // pred_check
      _
    $region23: #{tpu_custom_call.1} parent=1 // pred_check_branch
      %70 = sbr.rel (0) target = $region25
    $region24: #{tpu_custom_call.1} parent=1 // pred_region
      %s72 = ssub.s32 16, 16
      %73 = vsyncadd [#allocation11], %s72
      %s75 = sshll.u32 [#allocation10], 4
      %s76 = int_to_ptr.vmem [resolvable:$true] %s75
      %78 = dma.hbm_to_vmem [thread:$0]  %s5, 16, %s76, [#allocation11]
    $region25: #{tpu_custom_call.1} parent=1 // pred_fallthru
      _
    // Predicated region
    $region26: #{tpu_custom_call.1} parent=1 // pred_check
      _
    $region27: #{tpu_custom_call.1} parent=1 // pred_check_branch
      %80 = sbr.rel (0) target = $region29
    $region28: #{tpu_custom_call.1} parent=1 // pred_region
      %s82 = ssub.s32 64, 64
      %83 = vsyncadd [#allocation11], %s82
      %s85 = sshll.u32 [#allocation12], 4
      %s86 = int_to_ptr.vmem [resolvable:$true] %s85
      %88 = dma.hbm_to_vmem [thread:$0]  %s6, 64, %s86, [#allocation11]
    $region29: #{tpu_custom_call.1} parent=1 // pred_fallthru
      _
    // Predicated region
    $region30: #{tpu_custom_call.1} parent=1 // pred_check
      _
    $region31: #{tpu_custom_call.1} parent=1 // pred_check_branch
      %90 = sbr.rel (0) target = $region33
    $region32: #{tpu_custom_call.1} parent=1 // pred_region
      %s92 = ssub.s32 16, 16
      %93 = vsyncadd [#allocation14], %s92
      %s95 = sshll.u32 [#allocation13], 4
      %s96 = int_to_ptr.vmem [resolvable:$true] %s95
      %98 = dma.hbm_to_vmem [thread:$0]  %s7, 16, %s96, [#allocation14]
    $region33: #{tpu_custom_call.1} parent=1 // pred_fallthru
      _
    // Predicated region
    $region34: #{tpu_custom_call.1} parent=1 // pred_check
      _
    $region35: #{tpu_custom_call.1} parent=1 // pred_check_branch
      %100 = sbr.rel (0) target = $region37
    $region36: #{tpu_custom_call.1} parent=1 // pred_region
      _
    $region37: #{tpu_custom_call.1} parent=1 // pred_fallthru
      _
    // Predicated region
    $region38: #{tpu_custom_call.1} parent=1 // pred_check
      _
    $region39: #{tpu_custom_call.1} parent=1 // pred_check_branch
      %102 = sbr.rel (0) target = $region41
    $region40: #{tpu_custom_call.1} parent=1 // pred_region
      _
    $region41: #{tpu_custom_call.1} parent=1 // pred_fallthru
      _
    // Predicated region
    $region42: #{tpu_custom_call.1} parent=1 // pred_check
      _
    $region43: #{tpu_custom_call.1} parent=1 // pred_check_branch
      %104 = sbr.rel (0) target = $region45
    $region44: #{tpu_custom_call.1} parent=1 // pred_region
      _
    $region45: #{tpu_custom_call.1} parent=1 // pred_fallthru
      _
    // Predicated region
    $region46: #{tpu_custom_call.1} parent=1 // pred_check
      _
    $region47: #{tpu_custom_call.1} parent=1 // pred_check_branch
      %106 = sbr.rel (0) target = $region49
    $region48: #{tpu_custom_call.1} parent=1 // pred_region
      _
    $region49: #{tpu_custom_call.1} parent=1 // pred_fallthru
      _
    // Predicated region
    $region50: #{tpu_custom_call.1} parent=1 // pred_check
      _
    $region51: #{tpu_custom_call.1} parent=1 // pred_check_branch
      %108 = sbr.rel (0) target = $region53
    $region52: #{tpu_custom_call.1} parent=1 // pred_region
      _
    $region53: #{tpu_custom_call.1} parent=1 // pred_fallthru
      _
    // Predicated region
    $region54: #{tpu_custom_call.1} parent=1 // pred_check
      _
    $region55: #{tpu_custom_call.1} parent=1 // pred_check_branch
      %110 = sbr.rel (0) target = $region57
    $region56: #{tpu_custom_call.1} parent=1 // pred_region
      %111 = dma.done [#allocation5], 16
    $region57: #{tpu_custom_call.1} parent=1 // pred_fallthru
      _
    // Predicated region
    $region58: #{tpu_custom_call.1} parent=1 // pred_check
      _
    $region59: #{tpu_custom_call.1} parent=1 // pred_check_branch
      %113 = sbr.rel (0) target = $region61
    $region60: #{tpu_custom_call.1} parent=1 // pred_region
      %114 = dma.done [#allocation3], 64
    $region61: #{tpu_custom_call.1} parent=1 // pred_fallthru
      _
    // Predicated region
    $region62: #{tpu_custom_call.1} parent=1 // pred_check
      _
    $region63: #{tpu_custom_call.1} parent=1 // pred_check_branch
      %116 = sbr.rel (0) target = $region65
    $region64: #{tpu_custom_call.1} parent=1 // pred_region
      %117 = dma.done [#allocation8], 16
    $region65: #{tpu_custom_call.1} parent=1 // pred_fallthru
      _
    // Predicated region
    $region66: #{tpu_custom_call.1} parent=1 // pred_check
      _
    $region67: #{tpu_custom_call.1} parent=1 // pred_check_branch
      %119 = sbr.rel (0) target = $region69
    $region68: #{tpu_custom_call.1} parent=1 // pred_region
      %120 = dma.done [#allocation8], 512
    $region69: #{tpu_custom_call.1} parent=1 // pred_fallthru
      _
    // Predicated region
    $region70: #{tpu_custom_call.1} parent=1 // pred_check
      _
    $region71: #{tpu_custom_call.1} parent=1 // pred_check_branch
      %122 = sbr.rel (0) target = $region73
    $region72: #{tpu_custom_call.1} parent=1 // pred_region
      %123 = dma.done [#allocation11], 16
    $region73: #{tpu_custom_call.1} parent=1 // pred_fallthru
      _
    // Predicated region
    $region74: #{tpu_custom_call.1} parent=1 // pred_check
      _
    $region75: #{tpu_custom_call.1} parent=1 // pred_check_branch
      %125 = sbr.rel (0) target = $region77
    $region76: #{tpu_custom_call.1} parent=1 // pred_region
      %126 = dma.done [#allocation11], 64
    $region77: #{tpu_custom_call.1} parent=1 // pred_fallthru
      _
    // Predicated region
    $region78: #{tpu_custom_call.1} parent=1 // pred_check
      _
    $region79: #{tpu_custom_call.1} parent=1 // pred_check_branch
      %128 = sbr.rel (0) target = $region81
    $region80: #{tpu_custom_call.1} parent=1 // pred_region
      %129 = dma.done [#allocation14], 16
    $region81: #{tpu_custom_call.1} parent=1 // pred_fallthru
      _
    %130 = sfence
    %s131 = sld [smem:[#allocation2]]
    %s132 = sld [smem:[#allocation2 + $0x1]]
    %v133 = vld [vmem:[%s1] sm:$0xff]
    %v134 = vld [vmem:[#allocation6] sm:$0xf]
    %v135 = vld [vmem:[#allocation7] sm:$0x1]
    %v137 = vlaneseq
    %v138 = vshrl.u32 %v137, 7
    %v139 = vsub.s32 0, %v138
    %v140 = vrot.slane %v135, %v139
    %vm142 = vcmask 31744
    %v144 = vsel %vm142, %v133, 0
    %vm146 = vcmask 1043456
    %v148 = vsel %vm146, %v134, 0
    %150 = vmatprep.subr.mxu0 0.0
    %151 = vmatpush1.msra.mxu0 %v148
    %152 = vmatprep.subr.mxu0 0.0
    %153 = vmatpush1.msra.mxu0 0.0
    %154 = vmatprep.subr.mxu0 0.0
    %155 = vmatpush1.msra.mxu0 0.0
    %156 = vmatprep.subr.mxu0 0.0
    %157 = vmatpush1.msra.mxu0 0.0
    %158 = vmatprep.subr.mxu0 0.0
    %159 = vmatpush1.msra.mxu0 0.0
    %160 = vmatprep.subr.mxu0 0.0
    %161 = vmatpush1.msra.mxu0 0.0
    %162 = vmatprep.subr.mxu0 0.0
    %163 = vmatpush1.msra.mxu0 0.0
    %164 = vmatprep.subr.mxu0 0.0
    %165 = vmatpush1.msra.mxu0 0.0
    %166 = vmatprep.subr.mxu0 0.0
    %167 = vmatpush1.msra.mxu0 0.0
    %168 = vmatprep.subr.mxu0 0.0
    %169 = vmatpush1.msra.mxu0 0.0
    %170 = vmatprep.subr.mxu0 0.0
    %171 = vmatpush1.msra.mxu0 0.0
    %172 = vmatprep.subr.mxu0 0.0
    %173 = vmatpush1.msra.mxu0 0.0
    %174 = vmatprep.subr.mxu0 0.0
    %175 = vmatpush1.msra.mxu0 0.0
    %176 = vmatprep.subr.mxu0 0.0
    %177 = vmatpush1.msra.mxu0 0.0
    %178 = vmatprep.subr.mxu0 0.0
    %179 = vmatpush1.msra.mxu0 0.0
    %180 = vmatprep.subr.mxu0 0.0
    %181 = vmatpush1.msra.mxu0 0.0
    %182 = vmatprep.subr.mxu0 0.0
    %183 = vmatpush1.msra.mxu0 0.0
    %184 = vmatprep.subr.mxu0 0.0
    %185 = vmatpush1.msra.mxu0 0.0
    %186 = vmatprep.subr.mxu0 0.0
    %187 = vmatpush1.msra.mxu0 0.0
    %188 = vmatprep.subr.mxu0 0.0
    %189 = vmatpush1.msra.mxu0 0.0
    %190 = vmatprep.subr.mxu0 0.0
    %191 = vmatpush1.msra.mxu0 0.0
    %192 = vmatprep.subr.mxu0 0.0
    %193 = vmatpush1.msra.mxu0 0.0
    %194 = vmatprep.subr.mxu0 0.0
    %195 = vmatpush1.msra.mxu0 0.0
    %196 = vmatprep.subr.mxu0 0.0
    %197 = vmatpush1.msra.mxu0 0.0
    %198 = vmatprep.subr.mxu0 0.0
    %199 = vmatpush1.msra.mxu0 0.0
    %200 = vmatprep.subr.mxu0 0.0
    %201 = vmatpush1.msra.mxu0 0.0
    %202 = vmatprep.subr.mxu0 0.0
    %203 = vmatpush1.msra.mxu0 0.0
    %204 = vmatprep.subr.mxu0 0.0
    %205 = vmatpush1.msra.mxu0 0.0
    %206 = vmatprep.subr.mxu0 0.0
    %207 = vmatpush1.msra.mxu0 0.0
    %208 = vmatprep.subr.mxu0 0.0
    %209 = vmatpush1.msra.mxu0 0.0
    %210 = vmatprep.subr.mxu0 0.0
    %211 = vmatpush1.msra.mxu0 0.0
    %212 = vmatprep.subr.mxu0 0.0
    %213 = vmatpush1.msra.mxu0 0.0
    %214 = vmatprep.mubr.f32.mxu0 0.0
    %215 = vmatmul.mubr.f32.gmra.mrb[0].mxu0 %v144
    %v216 = vpop.f32.mrb[0].mxu0
    %v217 = vadd.f32 %v140, %v216
    %v218 = vpop.f32.mrb[0].mxu0
    %219 = vdwg.mxu0
    %v220 = vmax.f32 %v217, 0.0
    %v221 = vld [vmem:[#allocation9] sm:$0xff]
    %v222 = vld [vmem:[#allocation9 + $0x8] sm:$0xff]
    %v223 = vld [vmem:[#allocation9 + $0x10] sm:$0xff]
    %v224 = vld [vmem:[#allocation9 + $0x18] sm:$0xff]
    %v225 = vld [vmem:[#allocation10] sm:$0x1]
    %v227 = vlaneseq
    %v228 = vshrl.u32 %v227, 7
    %v229 = vsub.s32 0, %v228
    %v230 = vrot.slane %v225, %v229
    %vm232 = vcmask 261120
    %v234 = vsel %vm232, %v220, 0
    %236 = vmatprep.subr.mxu0 0.0
    %237 = vmatpush1.msra.mxu0 %v221
    %238 = vmatprep.subr.mxu0 0.0
    %239 = vmatpush1.msra.mxu0 %v222
    %240 = vmatprep.subr.mxu0 0.0
    %241 = vmatpush1.msra.mxu0 %v223
    %242 = vmatprep.subr.mxu0 0.0
    %243 = vmatpush1.msra.mxu0 %v224
    %244 = vmatprep.subr.mxu0 0.0
    %245 = vmatpush1.msra.mxu0 0.0
    %246 = vmatprep.subr.mxu0 0.0
    %247 = vmatpush1.msra.mxu0 0.0
    %248 = vmatprep.subr.mxu0 0.0
    %249 = vmatpush1.msra.mxu0 0.0
    %250 = vmatprep.subr.mxu0 0.0
    %251 = vmatpush1.msra.mxu0 0.0
    %252 = vmatprep.subr.mxu0 0.0
    %253 = vmatpush1.msra.mxu0 0.0
    %254 = vmatprep.subr.mxu0 0.0
    %255 = vmatpush1.msra.mxu0 0.0
    %256 = vmatprep.subr.mxu0 0.0
    %257 = vmatpush1.msra.mxu0 0.0
    %258 = vmatprep.subr.mxu0 0.0
    %259 = vmatpush1.msra.mxu0 0.0
    %260 = vmatprep.subr.mxu0 0.0
    %261 = vmatpush1.msra.mxu0 0.0
    %262 = vmatprep.subr.mxu0 0.0
    %263 = vmatpush1.msra.mxu0 0.0
    %264 = vmatprep.subr.mxu0 0.0
    %265 = vmatpush1.msra.mxu0 0.0
    %266 = vmatprep.subr.mxu0 0.0
    %267 = vmatpush1.msra.mxu0 0.0
    %268 = vmatprep.subr.mxu0 0.0
    %269 = vmatpush1.msra.mxu0 0.0
    %270 = vmatprep.subr.mxu0 0.0
    %271 = vmatpush1.msra.mxu0 0.0
    %272 = vmatprep.subr.mxu0 0.0
    %273 = vmatpush1.msra.mxu0 0.0
    %274 = vmatprep.subr.mxu0 0.0
    %275 = vmatpush1.msra.mxu0 0.0
    %276 = vmatprep.subr.mxu0 0.0
    %277 = vmatpush1.msra.mxu0 0.0
    %278 = vmatprep.subr.mxu0 0.0
    %279 = vmatpush1.msra.mxu0 0.0
    %280 = vmatprep.subr.mxu0 0.0
    %281 = vmatpush1.msra.mxu0 0.0
    %282 = vmatprep.subr.mxu0 0.0
    %283 = vmatpush1.msra.mxu0 0.0
    %284 = vmatprep.subr.mxu0 0.0
    %285 = vmatpush1.msra.mxu0 0.0
    %286 = vmatprep.subr.mxu0 0.0
    %287 = vmatpush1.msra.mxu0 0.0
    %288 = vmatprep.subr.mxu0 0.0
    %289 = vmatpush1.msra.mxu0 0.0
    %290 = vmatprep.subr.mxu0 0.0
    %291 = vmatpush1.msra.mxu0 0.0
    %292 = vmatprep.subr.mxu0 0.0
    %293 = vmatpush1.msra.mxu0 0.0
    %294 = vmatprep.subr.mxu0 0.0
    %295 = vmatpush1.msra.mxu0 0.0
    %296 = vmatprep.subr.mxu0 0.0
    %297 = vmatpush1.msra.mxu0 0.0
    %298 = vmatprep.subr.mxu0 0.0
    %299 = vmatpush1.msra.mxu0 0.0
    %300 = vmatprep.mubr.f32.mxu0 0.0
    %301 = vmatmul.mubr.f32.gmra.mrb[0].mxu0 %v234
    %v302 = vpop.f32.mrb[0].mxu0
    %v303 = vadd.f32 %v230, %v302
    %v304 = vpop.f32.mrb[0].mxu0
    %305 = vdwg.mxu0
    %v306 = vld [vmem:[#allocation12] sm:$0xf]
    %v307 = vld [vmem:[#allocation13] sm:$0x1]
    %v309 = vlaneseq
    %v310 = vshrl.u32 %v309, 7
    %v311 = vsub.s32 0, %v310
    %v312 = vrot.slane %v307, %v311
    %v315 = vsel %vm146, %v306, 0
    %317 = vmatprep.subr.mxu0 0.0
    %318 = vmatpush1.msra.mxu0 %v315
    %319 = vmatprep.subr.mxu0 0.0
    %320 = vmatpush1.msra.mxu0 0.0
    %321 = vmatprep.subr.mxu0 0.0
    %322 = vmatpush1.msra.mxu0 0.0
    %323 = vmatprep.subr.mxu0 0.0
    %324 = vmatpush1.msra.mxu0 0.0
    %325 = vmatprep.subr.mxu0 0.0
    %326 = vmatpush1.msra.mxu0 0.0
    %327 = vmatprep.subr.mxu0 0.0
    %328 = vmatpush1.msra.mxu0 0.0
    %329 = vmatprep.subr.mxu0 0.0
    %330 = vmatpush1.msra.mxu0 0.0
    %331 = vmatprep.subr.mxu0 0.0
    %332 = vmatpush1.msra.mxu0 0.0
    %333 = vmatprep.subr.mxu0 0.0
    %334 = vmatpush1.msra.mxu0 0.0
    %335 = vmatprep.subr.mxu0 0.0
    %336 = vmatpush1.msra.mxu0 0.0
    %337 = vmatprep.subr.mxu0 0.0
    %338 = vmatpush1.msra.mxu0 0.0
    %339 = vmatprep.subr.mxu0 0.0
    %340 = vmatpush1.msra.mxu0 0.0
    %341 = vmatprep.subr.mxu0 0.0
    %342 = vmatpush1.msra.mxu0 0.0
    %343 = vmatprep.subr.mxu0 0.0
    %344 = vmatpush1.msra.mxu0 0.0
    %345 = vmatprep.subr.mxu0 0.0
    %346 = vmatpush1.msra.mxu0 0.0
    %347 = vmatprep.subr.mxu0 0.0
    %348 = vmatpush1.msra.mxu0 0.0
    %349 = vmatprep.subr.mxu0 0.0
    %350 = vmatpush1.msra.mxu0 0.0
    %351 = vmatprep.subr.mxu0 0.0
    %352 = vmatpush1.msra.mxu0 0.0
    %353 = vmatprep.subr.mxu0 0.0
    %354 = vmatpush1.msra.mxu0 0.0
    %355 = vmatprep.subr.mxu0 0.0
    %356 = vmatpush1.msra.mxu0 0.0
    %357 = vmatprep.subr.mxu0 0.0
    %358 = vmatpush1.msra.mxu0 0.0
    %359 = vmatprep.subr.mxu0 0.0
    %360 = vmatpush1.msra.mxu0 0.0
    %361 = vmatprep.subr.mxu0 0.0
    %362 = vmatpush1.msra.mxu0 0.0
    %363 = vmatprep.subr.mxu0 0.0
    %364 = vmatpush1.msra.mxu0 0.0
    %365 = vmatprep.subr.mxu0 0.0
    %366 = vmatpush1.msra.mxu0 0.0
    %367 = vmatprep.subr.mxu0 0.0
    %368 = vmatpush1.msra.mxu0 0.0
    %369 = vmatprep.subr.mxu0 0.0
    %370 = vmatpush1.msra.mxu0 0.0
    %371 = vmatprep.subr.mxu0 0.0
    %372 = vmatpush1.msra.mxu0 0.0
    %373 = vmatprep.subr.mxu0 0.0
    %374 = vmatpush1.msra.mxu0 0.0
    %375 = vmatprep.subr.mxu0 0.0
    %376 = vmatpush1.msra.mxu0 0.0
    %377 = vmatprep.subr.mxu0 0.0
    %378 = vmatpush1.msra.mxu0 0.0
    %379 = vmatprep.subr.mxu0 0.0
    %380 = vmatpush1.msra.mxu0 0.0
    %381 = vmatprep.mubr.f32.mxu0 0.0
    %382 = vmatmul.mubr.f32.gmra.mrb[0].mxu0 %v144
    %v383 = vpop.f32.mrb[0].mxu0
    %v384 = vadd.f32 %v312, %v383
    %v385 = vpop.f32.mrb[0].mxu0
    %386 = vdwg.mxu0
    %v387 = vmax.f32 %v384, 0.0
    %v388 = vld [vmem:[%s8] sm:$0xff]
    %v389 = vld [vmem:[%s8 + $0x8] sm:$0xff]
    %v390 = vld [vmem:[%s8 + $0x10] sm:$0xff]
    %v391 = vld [vmem:[%s8 + $0x18] sm:$0xff]
    %v392 = vld [vmem:[%s9] sm:$0x1]
    %v394 = vlaneseq
    %v395 = vshrl.u32 %v394, 7
    %v396 = vsub.s32 0, %v395
    %v397 = vrot.slane %v392, %v396
    %v400 = vsel %vm232, %v387, 0
    %402 = vmatprep.subr.mxu0 0.0
    %403 = vmatpush1.msra.mxu0 %v388
    %404 = vmatprep.subr.mxu0 0.0
    %405 = vmatpush1.msra.mxu0 %v389
    %406 = vmatprep.subr.mxu0 0.0
    %407 = vmatpush1.msra.mxu0 %v390
    %408 = vmatprep.subr.mxu0 0.0
    %409 = vmatpush1.msra.mxu0 %v391
    %410 = vmatprep.subr.mxu0 0.0
    %411 = vmatpush1.msra.mxu0 0.0
    %412 = vmatprep.subr.mxu0 0.0
    %413 = vmatpush1.msra.mxu0 0.0
    %414 = vmatprep.subr.mxu0 0.0
    %415 = vmatpush1.msra.mxu0 0.0
    %416 = vmatprep.subr.mxu0 0.0
    %417 = vmatpush1.msra.mxu0 0.0
    %418 = vmatprep.subr.mxu0 0.0
    %419 = vmatpush1.msra.mxu0 0.0
    %420 = vmatprep.subr.mxu0 0.0
    %421 = vmatpush1.msra.mxu0 0.0
    %422 = vmatprep.subr.mxu0 0.0
    %423 = vmatpush1.msra.mxu0 0.0
    %424 = vmatprep.subr.mxu0 0.0
    %425 = vmatpush1.msra.mxu0 0.0
    %426 = vmatprep.subr.mxu0 0.0
    %427 = vmatpush1.msra.mxu0 0.0
    %428 = vmatprep.subr.mxu0 0.0
    %429 = vmatpush1.msra.mxu0 0.0
    %430 = vmatprep.subr.mxu0 0.0
    %431 = vmatpush1.msra.mxu0 0.0
    %432 = vmatprep.subr.mxu0 0.0
    %433 = vmatpush1.msra.mxu0 0.0
    %434 = vmatprep.subr.mxu0 0.0
    %435 = vmatpush1.msra.mxu0 0.0
    %436 = vmatprep.subr.mxu0 0.0
    %437 = vmatpush1.msra.mxu0 0.0
    %438 = vmatprep.subr.mxu0 0.0
    %439 = vmatpush1.msra.mxu0 0.0
    %440 = vmatprep.subr.mxu0 0.0
    %441 = vmatpush1.msra.mxu0 0.0
    %442 = vmatprep.subr.mxu0 0.0
    %443 = vmatpush1.msra.mxu0 0.0
    %444 = vmatprep.subr.mxu0 0.0
    %445 = vmatpush1.msra.mxu0 0.0
    %446 = vmatprep.subr.mxu0 0.0
    %447 = vmatpush1.msra.mxu0 0.0
    %448 = vmatprep.subr.mxu0 0.0
    %449 = vmatpush1.msra.mxu0 0.0
    %450 = vmatprep.subr.mxu0 0.0
    %451 = vmatpush1.msra.mxu0 0.0
    %452 = vmatprep.subr.mxu0 0.0
    %453 = vmatpush1.msra.mxu0 0.0
    %454 = vmatprep.subr.mxu0 0.0
    %455 = vmatpush1.msra.mxu0 0.0
    %456 = vmatprep.subr.mxu0 0.0
    %457 = vmatpush1.msra.mxu0 0.0
    %458 = vmatprep.subr.mxu0 0.0
    %459 = vmatpush1.msra.mxu0 0.0
    %460 = vmatprep.subr.mxu0 0.0
    %461 = vmatpush1.msra.mxu0 0.0
    %462 = vmatprep.subr.mxu0 0.0
    %463 = vmatpush1.msra.mxu0 0.0
    %464 = vmatprep.subr.mxu0 0.0
    %465 = vmatpush1.msra.mxu0 0.0
    %466 = vmatprep.mubr.f32.mxu0 0.0
    %467 = vmatmul.mubr.f32.gmra.mrb[0].mxu0 %v400
    %v468 = vpop.f32.mrb[0].mxu0
    %v469 = vadd.f32 %v397, %v468
    %v470 = vpop.f32.mrb[0].mxu0
    %471 = vdwg.mxu0
    %v472 = vstv %s131
    %v473 = vmul.f32 %v303, %v472
    %474 = vmax.xlane.f32.xlu0 %v473
    %v475 = vpop.xlane.xlu0 %474
    %v476 = vsub.f32 %v473, %v475
    %v477 = vmul.f32 %v476, 1.442695
    %v478 = vpow.pop %v477
    %479 = vadd.xlane.f32.xlu0 %v478
    %v480 = vpop.xlane.xlu0 %479
    %v481 = vlog2.pop %v480
    %v482 = vmul.f32 %v481, 0.6931472
    %v483 = vadd.f32 %v482, %v475
    %v484 = vsub.f32 %v473, %v483
    %v485 = vld [vmem:[%s10] sm:$0x1]
    %v487 = vlaneseq
    %v488 = vshrl.u32 %v487, 7
    %v489 = vsub.s32 0, %v488
    %v490 = vrot.slane %v485, %v489
    %v492 = vsub.f32 %v469, %v490
    %v493 = vstv %s132
    %v494 = vmul.f32 %v492, %v493
    %495 = vmax.xlane.f32.xlu0 %v494
    %v496 = vpop.xlane.xlu0 %495
    %v497 = vsub.f32 %v494, %v496
    %v498 = vmul.f32 %v497, 1.442695
    %v499 = vpow.pop %v498
    %500 = vadd.xlane.f32.xlu0 %v499
    %v501 = vpop.xlane.xlu0 %500
    %v502 = vrcp.pop %v501
    %v503 = vmul.f32 %v499, %v502
    %504 = vmatprep.subr.mxu0 0.0
    %505 = vmatpush1.xpose.msra.mxu0 %v484
    %506 = vmatprep.subr.mxu0 0.0
    %507 = vmatpush1.xpose.msra.mxu0 0.0
    %508 = vmatprep.subr.mxu0 0.0
    %509 = vmatpush1.xpose.msra.mxu0 0.0
    %510 = vmatprep.subr.mxu0 0.0
    %511 = vmatpush1.xpose.msra.mxu0 0.0
    %512 = vmatprep.subr.mxu0 0.0
    %513 = vmatpush1.xpose.msra.mxu0 0.0
    %514 = vmatprep.subr.mxu0 0.0
    %515 = vmatpush1.xpose.msra.mxu0 0.0
    %516 = vmatprep.subr.mxu0 0.0
    %517 = vmatpush1.xpose.msra.mxu0 0.0
    %518 = vmatprep.subr.mxu0 0.0
    %519 = vmatpush1.xpose.msra.mxu0 0.0
    %520 = vmatprep.subr.mxu0 0.0
    %521 = vmatpush1.xpose.msra.mxu0 0.0
    %522 = vmatprep.subr.mxu0 0.0
    %523 = vmatpush1.xpose.msra.mxu0 0.0
    %524 = vmatprep.subr.mxu0 0.0
    %525 = vmatpush1.xpose.msra.mxu0 0.0
    %526 = vmatprep.subr.mxu0 0.0
    %527 = vmatpush1.xpose.msra.mxu0 0.0
    %528 = vmatprep.subr.mxu0 0.0
    %529 = vmatpush1.xpose.msra.mxu0 0.0
    %530 = vmatprep.subr.mxu0 0.0
    %531 = vmatpush1.xpose.msra.mxu0 0.0
    %532 = vmatprep.subr.mxu0 0.0
    %533 = vmatpush1.xpose.msra.mxu0 0.0
    %534 = vmatprep.subr.mxu0 0.0
    %535 = vmatpush1.xpose.msra.mxu0 0.0
    %536 = vmatprep.subr.mxu0 0.0
    %537 = vmatpush1.xpose.msra.mxu0 0.0
    %538 = vmatprep.subr.mxu0 0.0
    %539 = vmatpush1.xpose.msra.mxu0 0.0
    %540 = vmatprep.subr.mxu0 0.0
    %541 = vmatpush1.xpose.msra.mxu0 0.0
    %542 = vmatprep.subr.mxu0 0.0
    %543 = vmatpush1.xpose.msra.mxu0 0.0
    %544 = vmatprep.subr.mxu0 0.0
    %545 = vmatpush1.xpose.msra.mxu0 0.0
    %546 = vmatprep.subr.mxu0 0.0
    %547 = vmatpush1.xpose.msra.mxu0 0.0
    %548 = vmatprep.subr.mxu0 0.0
    %549 = vmatpush1.xpose.msra.mxu0 0.0
    %550 = vmatprep.subr.mxu0 0.0
    %551 = vmatpush1.xpose.msra.mxu0 0.0
    %552 = vmatprep.subr.mxu0 0.0
    %553 = vmatpush1.xpose.msra.mxu0 0.0
    %554 = vmatprep.subr.mxu0 0.0
    %555 = vmatpush1.xpose.msra.mxu0 0.0
    %556 = vmatprep.subr.mxu0 0.0
    %557 = vmatpush1.xpose.msra.mxu0 0.0
    %558 = vmatprep.subr.mxu0 0.0
    %559 = vmatpush1.xpose.msra.mxu0 0.0
    %560 = vmatprep.subr.mxu0 0.0
    %561 = vmatpush1.xpose.msra.mxu0 0.0
    %562 = vmatprep.subr.mxu0 0.0
    %563 = vmatpush1.xpose.msra.mxu0 0.0
    %564 = vmatprep.subr.mxu0 0.0
    %565 = vmatpush1.xpose.msra.mxu0 0.0
    %566 = vmatprep.subr.mxu0 0.0
    %567 = vmatpush1.xpose.msra.mxu0 0.0
    %568 = vmatprep.mubr.f32.mxu0 0.0
    %569 = vmatmul.mubr.f32.gmra.mrb[0].mxu0 %v503
    %v570 = vpop.f32.mrb[0].mxu0
    %v571 = vadd.f32 0.0, %v570
    %v572 = vpop.f32.mrb[0].mxu0
    %573 = vdwg.mxu0
    %v574 = vld [vmem:[%s11] sm:$0xff]
    %v575 = vmul.f32 %v571, %v574
    %vm576 = vcmask 64512
    %v577 = vsel %vm576, %v575, 0.0
    %578 = vadd.xlane.f32.xlu0 %v577
    %v579 = vpop.xlane.xlu0 %578
    %v580 = vrot.slane %v579, 4
    %v581 = vadd.f32 %v579, %v580
    %v582 = vrot.slane %v581, 2
    %v583 = vadd.f32 %v581, %v582
    %v584 = vrot.slane %v583, 1
    %v585 = vadd.f32 %v583, %v584
    %v586 = vmul.f32 %v585, -0.083333336
    %vm587 = vcmask 0
    %588 = vst.msk [vmem:[#allocation15] sm:$0x1] %vm587, %v586
    %v589 = vld [vmem:[%s12] sm:$0x3]
    %v591 = vsel %vm576, %v589, 0
    %593 = vmatprep.subr.mxu0 0.0
    %594 = vmatpush1.msra.mxu0 %v303
    %595 = vmatprep.subr.mxu0 0.0
    %596 = vmatpush1.msra.mxu0 0.0
    %597 = vmatprep.subr.mxu0 0.0
    %598 = vmatpush1.msra.mxu0 0.0
    %599 = vmatprep.subr.mxu0 0.0
    %600 = vmatpush1.msra.mxu0 0.0
    %601 = vmatprep.subr.mxu0 0.0
    %602 = vmatpush1.msra.mxu0 0.0
    %603 = vmatprep.subr.mxu0 0.0
    %604 = vmatpush1.msra.mxu0 0.0
    %605 = vmatprep.subr.mxu0 0.0
    %606 = vmatpush1.msra.mxu0 0.0
    %607 = vmatprep.subr.mxu0 0.0
    %608 = vmatpush1.msra.mxu0 0.0
    %609 = vmatprep.subr.mxu0 0.0
    %610 = vmatpush1.msra.mxu0 0.0
    %611 = vmatprep.subr.mxu0 0.0
    %612 = vmatpush1.msra.mxu0 0.0
    %613 = vmatprep.subr.mxu0 0.0
    %614 = vmatpush1.msra.mxu0 0.0
    %615 = vmatprep.subr.mxu0 0.0
    %616 = vmatpush1.msra.mxu0 0.0
    %617 = vmatprep.subr.mxu0 0.0
    %618 = vmatpush1.msra.mxu0 0.0
    %619 = vmatprep.subr.mxu0 0.0
    %620 = vmatpush1.msra.mxu0 0.0
    %621 = vmatprep.subr.mxu0 0.0
    %622 = vmatpush1.msra.mxu0 0.0
    %623 = vmatprep.subr.mxu0 0.0
    %624 = vmatpush1.msra.mxu0 0.0
    %625 = vmatprep.subr.mxu0 0.0
    %626 = vmatpush1.msra.mxu0 0.0
    %627 = vmatprep.subr.mxu0 0.0
    %628 = vmatpush1.msra.mxu0 0.0
    %629 = vmatprep.subr.mxu0 0.0
    %630 = vmatpush1.msra.mxu0 0.0
    %631 = vmatprep.subr.mxu0 0.0
    %632 = vmatpush1.msra.mxu0 0.0
    %633 = vmatprep.subr.mxu0 0.0
    %634 = vmatpush1.msra.mxu0 0.0
    %635 = vmatprep.subr.mxu0 0.0
    %636 = vmatpush1.msra.mxu0 0.0
    %637 = vmatprep.subr.mxu0 0.0
    %638 = vmatpush1.msra.mxu0 0.0
    %639 = vmatprep.subr.mxu0 0.0
    %640 = vmatpush1.msra.mxu0 0.0
    %641 = vmatprep.subr.mxu0 0.0
    %642 = vmatpush1.msra.mxu0 0.0
    %643 = vmatprep.subr.mxu0 0.0
    %644 = vmatpush1.msra.mxu0 0.0
    %645 = vmatprep.subr.mxu0 0.0
    %646 = vmatpush1.msra.mxu0 0.0
    %647 = vmatprep.subr.mxu0 0.0
    %648 = vmatpush1.msra.mxu0 0.0
    %649 = vmatprep.subr.mxu0 0.0
    %650 = vmatpush1.msra.mxu0 0.0
    %651 = vmatprep.subr.mxu0 0.0
    %652 = vmatpush1.msra.mxu0 0.0
    %653 = vmatprep.subr.mxu0 0.0
    %654 = vmatpush1.msra.mxu0 0.0
    %655 = vmatprep.subr.mxu0 0.0
    %656 = vmatpush1.msra.mxu0 0.0
    %657 = vmatprep.mubr.f32.mxu0 0.0
    %658 = vmatmul.mubr.f32.gmra.mrb[0].mxu0 %v591
    %v659 = vpop.f32.mrb[0].mxu0
    %v660 = vadd.f32 0.0, %v659
    %v661 = vpop.f32.mrb[0].mxu0
    %662 = vdwg.mxu0
    %663 = vst [vmem:[#allocation16] sm:$0x3] %v660
    // Predicated region
    $region82: #{tpu_custom_call.1} parent=1 // pred_check
      _
    $region83: #{tpu_custom_call.1} parent=1 // pred_check_branch
      %665 = sbr.rel (0) target = $region85
    $region84: #{tpu_custom_call.1} parent=1 // pred_region
      %s667 = ssub.s32 16, 16
      %668 = vsyncadd [#allocation4], %s667
      %s670 = sshll.u32 [#allocation15], 4
      %s671 = int_to_ptr.vmem [resolvable:$true] %s670
      %673 = dma.vmem_to_hbm [thread:$0]  %s671, 16, %s13, [#allocation4]
    $region85: #{tpu_custom_call.1} parent=1 // pred_fallthru
      _
    // Predicated region
    $region86: #{tpu_custom_call.1} parent=1 // pred_check
      _
    $region87: #{tpu_custom_call.1} parent=1 // pred_check_branch
      %675 = sbr.rel (0) target = $region89
    $region88: #{tpu_custom_call.1} parent=1 // pred_region
      %s677 = ssub.s32 32, 32
      %678 = vsyncadd [#allocation17], %s677
      %s680 = sshll.u32 [#allocation16], 4
      %s681 = int_to_ptr.vmem [resolvable:$true] %s680
      %683 = dma.vmem_to_hbm [thread:$0]  %s681, 32, %s14, [#allocation17]
    $region89: #{tpu_custom_call.1} parent=1 // pred_fallthru
      _
    // Predicated region
    $region90: #{tpu_custom_call.1} parent=1 // pred_check
      _
    $region91: #{tpu_custom_call.1} parent=1 // pred_check_branch
      %685 = sbr.rel (0) target = $region93
    $region92: #{tpu_custom_call.1} parent=1 // pred_region
      %686 = dma.done [#allocation4], 16
    $region93: #{tpu_custom_call.1} parent=1 // pred_fallthru
      _
    // Predicated region
    $region94: #{tpu_custom_call.1} parent=1 // pred_check
      _
    $region95: #{tpu_custom_call.1} parent=1 // pred_check_branch
      %688 = sbr.rel (0) target = $region97
    $region96: #{tpu_custom_call.1} parent=1 // pred_region
      %689 = dma.done [#allocation17], 32
    $region97: #{tpu_custom_call.1} parent=1 // pred_fallthru
      _
    %690 = vsyncpa [#allocation3], 1
    %691 = vsyncpa [#allocation8], 1
    %692 = vsyncpa [#allocation11], 1
    %693 = vsyncpa [#allocation14], 1
    %694 = vsyncpa [#allocation4], 1
    %695 = vsyncpa [#allocation17], 1
    %696 = vsyncpa [#allocation5], 1

</llo_original>
